<compile_context>
chip_gen: v6e
topology: v6e:2x2x1
jax: 0.10.0
libtpu: 0.0.40
codegen_flags: <defaults>
</compile_context>

<pallas_src>
import jax
import jax.numpy as jnp
from jax.experimental import pallas as pl
from jax.experimental.pallas import tpu as pltpu


def policy_net_kernel(x_ref, w1_ref, b1_ref, w2_ref, b2_ref, out_ref):
    """Fused MLP + softmax on one batch tile.

    x_ref  : (TILE_B, S)   input dtype (bf16 or f32)
    w1_ref : (S, H)        same dtype as x
    b1_ref : (1, H)        f32
    w2_ref : (H, A)        same dtype as x
    b2_ref : (1, A)        f32
    out_ref: (TILE_B, A)   f32
    """
    # fc1 (+ bias, ReLU): MXU matmul with f32 accumulation, elementwise in f32.
    h = jnp.dot(x_ref[...], w1_ref[...], preferred_element_type=jnp.float32)
    h = jnp.maximum(h + b1_ref[...], 0.0)

    # fc2: cast activations to the weight dtype (no-op for f32), accumulate f32.
    logits = jnp.dot(h.astype(w2_ref.dtype), w2_ref[...],
                     preferred_element_type=jnp.float32) + b2_ref[...]

    # Softmax over actions (last axis == PyTorch dim=1 for a 2-D input).
    m = jnp.max(logits, axis=-1, keepdims=True)
    e = jnp.exp(logits - m)
    denom = jnp.sum(e, axis=-1, keepdims=True)
    out_ref[...] = (e / denom).astype(out_ref.dtype)   # exact divide


def policy_net_forward(x, w1, b1, w2, b2, *, tile_b=1024, use_bf16=True):
    """x: (B, S); w1: (S, H); b1: (., H); w2: (H, A); b2: (., A) -> (B, A) f32."""
    B, S = x.shape
    H = w1.shape[1]
    A = w2.shape[1]

    b1 = b1.reshape(1, H).astype(jnp.float32)
    b2 = b2.reshape(1, A).astype(jnp.float32)

    # Halve input DMA bytes / MXU passes: bf16 matmul operands, f32 accumulate.
    if use_bf16 and x.dtype == jnp.float32:
        x = x.astype(jnp.bfloat16)
        w1 = w1.astype(jnp.bfloat16)
        w2 = w2.astype(jnp.bfloat16)

    # Batch tile: multiple of 8 (sublanes); guarantee >= 2 grid steps when the
    # batch allows so the "parallel" axis can be split across v7x's two TCs.
    tile_b = max(8, (int(tile_b) // 8) * 8)
    if B > 8:
        half = ((((B + 1) // 2) + 7) // 8) * 8      # round_up(ceil(B/2), 8)
        tile_b = min(tile_b, half)
    else:
        tile_b = 8
    grid = (pl.cdiv(B, tile_b),)   # partial tail block is masked by Pallas

    return pl.pallas_call(
        policy_net_kernel,
        out_shape=jax.ShapeDtypeStruct((B, A), jnp.float32),
        grid_spec=pltpu.PrefetchScalarGridSpec(
            num_scalar_prefetch=0,
            grid=grid,
            in_specs=[
                # Batch-tiled input (double-buffered across grid steps).
                pl.BlockSpec((tile_b, S), lambda i: (i, 0)),
                # Weights / biases: constant block index -> fetched once,
                # VMEM-resident across the whole grid.
                pl.BlockSpec((S, H), lambda i: (0, 0)),
                pl.BlockSpec((1, H), lambda i: (0, 0)),
                pl.BlockSpec((H, A), lambda i: (0, 0)),
                pl.BlockSpec((1, A), lambda i: (0, 0)),
            ],
            out_specs=pl.BlockSpec((tile_b, A), lambda i: (i, 0)),
        ),
        compiler_params=pltpu.CompilerParams(
            # Independent batch tiles: lets v7x split the grid across both TCs.
            dimension_semantics=("parallel",),
        ),
    )(x, w1, b1, w2, b2)


def init_policy_net_params(key, state_dim, hidden_dim, action_dim):
    """Deterministic init mimicking nn.Linear's U(-1/sqrt(fan_in), 1/sqrt(fan_in))."""
    k1, k2, k3, k4 = jax.random.split(key, 4)
    bound1 = 1.0 / jnp.sqrt(jnp.float32(state_dim))
    bound2 = 1.0 / jnp.sqrt(jnp.float32(hidden_dim))
    # Stored as (in, out) so the kernel computes x @ W + b (== nn.Linear).
    w1 = jax.random.uniform(k1, (state_dim, hidden_dim), jnp.float32, -bound1, bound1)
    b1 = jax.random.uniform(k2, (1, hidden_dim), jnp.float32, -bound1, bound1)
    w2 = jax.random.uniform(k3, (hidden_dim, action_dim), jnp.float32, -bound2, bound2)
    b2 = jax.random.uniform(k4, (1, action_dim), jnp.float32, -bound2, bound2)
    return w1, b1, w2, b2


if __name__ == "__main__":
    # Shapes consistent with the module; batch=50 exercises a 2-step grid
    # (tile_b clamps to 32) with a masked partial tail block.
    batch, state_dim, hidden_dim, action_dim = 50, 16, 32, 4

    key = jax.random.PRNGKey(0)
    kx, kp = jax.random.split(key)
    x = jax.random.normal(kx, (batch, state_dim), dtype=jnp.float32)
    w1, b1, w2, b2 = init_policy_net_params(kp, state_dim, hidden_dim, action_dim)

    # Plain-JAX f32 reference (same math as the PyTorch module).
    h_ref = jnp.maximum(x @ w1 + b1, 0.0)
    ref = jax.nn.softmax(h_ref @ w2 + b2, axis=1)

    # 1) Exact-f32 matmul path: tight tolerance.
    out_f32 = jax.block_until_ready(
        policy_net_forward(x, w1, b1, w2, b2, use_bf16=False))
    assert out_f32.shape == (batch, action_dim)
    assert jnp.allclose(out_f32, ref, atol=5e-3, rtol=5e-3), \
        float(jnp.max(jnp.abs(out_f32 - ref)))
    assert jnp.allclose(jnp.sum(out_f32, axis=1), 1.0, atol=1e-4)

    # 2) Default bf16-matmul path (perf path): slightly relaxed tolerance.
    out = jax.block_until_ready(policy_net_forward(x, w1, b1, w2, b2))
    assert out.shape == (batch, action_dim)
    assert jnp.allclose(out, ref, atol=2e-2, rtol=2e-2), \
        float(jnp.max(jnp.abs(out - ref)))
    assert jnp.allclose(jnp.sum(out, axis=1), 1.0, atol=1e-4)

    print("KERNEL_OK")
</pallas_src>

<mosaic_0001>
module attributes {stable_mosaic.version = 11 : i64} {
  func.func @policy_net_kernel(%arg0: i32, %arg1: memref<32x16xf32, #tpu.memory_space<vmem>>, %arg2: memref<16x32xf32, #tpu.memory_space<vmem>>, %arg3: memref<1x32xf32, #tpu.memory_space<vmem>>, %arg4: memref<32x4xf32, #tpu.memory_space<vmem>>, %arg5: memref<1x4xf32, #tpu.memory_space<vmem>>, %arg6: memref<32x4xf32, #tpu.memory_space<vmem>>) attributes {dimension_semantics = [#tpu.dimension_semantics<parallel>], iteration_bounds = array<i64: 2>, scalar_prefetch = 0 : i64, scratch_operands = 0 : i64, tpu.core_type = #tpu.core_type<tc>, window_params = [{transform_indices = @transform_0, window_bounds = array<i64: 32, 16>}, {pipeline_mode = #tpu.pipeline_mode<synchronous>, transform_indices = @transform_1, window_bounds = array<i64: 16, 32>}, {pipeline_mode = #tpu.pipeline_mode<synchronous>, transform_indices = @transform_2, window_bounds = array<i64: 1, 32>}, {pipeline_mode = #tpu.pipeline_mode<synchronous>, transform_indices = @transform_3, window_bounds = array<i64: 32, 4>}, {pipeline_mode = #tpu.pipeline_mode<synchronous>, transform_indices = @transform_4, window_bounds = array<i64: 1, 4>}, {transform_indices = @transform_5, window_bounds = array<i64: 32, 4>}]} {
    %c0 = arith.constant 0 : index
    %c0_0 = arith.constant 0 : index
    %0 = vector.load %arg1[%c0, %c0_0] : memref<32x16xf32, #tpu.memory_space<vmem>>, vector<32x16xf32>
    %c0_1 = arith.constant 0 : index
    %c0_2 = arith.constant 0 : index
    %1 = vector.load %arg2[%c0_1, %c0_2] : memref<16x32xf32, #tpu.memory_space<vmem>>, vector<16x32xf32>
    %cst = arith.constant dense<0.000000e+00> : vector<32x32xf32>
    %2 = tpu.matmul %0, %1, %cst {dimension_numbers = #tpu.dot_dimension_numbers<[1], [0], [0], [1], [0, 0, 1, 1], [], []>} : vector<32x16xf32>, vector<16x32xf32>, vector<32x32xf32> -> vector<32x32xf32>
    %c0_3 = arith.constant 0 : index
    %c0_4 = arith.constant 0 : index
    %3 = vector.load %arg3[%c0_3, %c0_4] : memref<1x32xf32, #tpu.memory_space<vmem>>, vector<1x32xf32>
    %4 = vector.broadcast %3 : vector<1x32xf32> to vector<32x32xf32>
    %5 = arith.addf %2, %4 : vector<32x32xf32>
    %cst_5 = arith.constant 0.000000e+00 : f32
    %6 = vector.broadcast %cst_5 : f32 to vector<32x32xf32>
    %7 = arith.maximumf %5, %6 : vector<32x32xf32>
    %c0_6 = arith.constant 0 : index
    %c0_7 = arith.constant 0 : index
    %8 = vector.load %arg4[%c0_6, %c0_7] : memref<32x4xf32, #tpu.memory_space<vmem>>, vector<32x4xf32>
    %cst_8 = arith.constant dense<0.000000e+00> : vector<32x4xf32>
    %9 = tpu.matmul %7, %8, %cst_8 {dimension_numbers = #tpu.dot_dimension_numbers<[1], [0], [0], [1], [0, 0, 1, 1], [], []>} : vector<32x32xf32>, vector<32x4xf32>, vector<32x4xf32> -> vector<32x4xf32>
    %c0_9 = arith.constant 0 : index
    %c0_10 = arith.constant 0 : index
    %10 = vector.load %arg5[%c0_9, %c0_10] : memref<1x4xf32, #tpu.memory_space<vmem>>, vector<1x4xf32>
    %11 = vector.broadcast %10 : vector<1x4xf32> to vector<32x4xf32>
    %12 = arith.addf %9, %11 : vector<32x4xf32>
    %cst_11 = arith.constant dense<0xFF800000> : vector<32xf32>
    %13 = vector.multi_reduction <maximumf>, %12, %cst_11 [1] : vector<32x4xf32> to vector<32xf32>
    %14 = vector.shape_cast %13 : vector<32xf32> to vector<32x1xf32>
    %15 = vector.broadcast %14 : vector<32x1xf32> to vector<32x4xf32>
    %16 = arith.subf %12, %15 : vector<32x4xf32>
    %17 = math.exp %16 : vector<32x4xf32>
    %cst_12 = arith.constant dense<0.000000e+00> : vector<32xf32>
    %18 = vector.multi_reduction <add>, %17, %cst_12 [1] : vector<32x4xf32> to vector<32xf32>
    %19 = vector.shape_cast %18 : vector<32xf32> to vector<32x1xf32>
    %20 = vector.broadcast %19 : vector<32x1xf32> to vector<32x4xf32>
    %21 = arith.divf %17, %20 : vector<32x4xf32>
    %c0_13 = arith.constant 0 : index
    %c0_14 = arith.constant 0 : index
    %22 = vector.load %arg6[%c0_13, %c0_14] : memref<32x4xf32, #tpu.memory_space<vmem>>, vector<32x4xf32>
    tpu.vector_store %arg6[%c0_13, %c0_14], %21 {strides = array<i32>} : memref<32x4xf32, #tpu.memory_space<vmem>>, vector<32x4xf32>,
    return
  }
  func.func @transform_0(%arg0: i32) -> (i32, i32) {
    %c0_i32 = arith.constant 0 : i32
    %c0_i32_0 = arith.constant 0 : i32
    return %arg0, %c0_i32 : i32, i32
  }
  func.func @transform_1(%arg0: i32) -> (i32, i32) {
    %c0_i32 = arith.constant 0 : i32
    %c0_i32_0 = arith.constant 0 : i32
    %c0_i32_1 = arith.constant 0 : i32
    return %c0_i32, %c0_i32_0 : i32, i32
  }
  func.func @transform_2(%arg0: i32) -> (i32, i32) {
    %c0_i32 = arith.constant 0 : i32
    %c0_i32_0 = arith.constant 0 : i32
    %c0_i32_1 = arith.constant 0 : i32
    return %c0_i32, %c0_i32_0 : i32, i32
  }
  func.func @transform_3(%arg0: i32) -> (i32, i32) {
    %c0_i32 = arith.constant 0 : i32
    %c0_i32_0 = arith.constant 0 : i32
    %c0_i32_1 = arith.constant 0 : i32
    return %c0_i32, %c0_i32_0 : i32, i32
  }
  func.func @transform_4(%arg0: i32) -> (i32, i32) {
    %c0_i32 = arith.constant 0 : i32
    %c0_i32_0 = arith.constant 0 : i32
    %c0_i32_1 = arith.constant 0 : i32
    return %c0_i32, %c0_i32_0 : i32, i32
  }
  func.func @transform_5(%arg0: i32) -> (i32, i32) {
    %c0_i32 = arith.constant 0 : i32
    %c0_i32_0 = arith.constant 0 : i32
    return %arg0, %c0_i32 : i32, i32
  }
}

</mosaic_0001>

<llo_original>
// kernel: tpu_custom_call.1
$region0: #{tpu_custom_call.1}
  #allocation0 [shape = 'u32[]', space=smem, size = 0x4, offset = 0x4, fixed_abs, tag = 'smem constant byte address 0x4 - core index']
  #allocation1 [shape = 'u32[144,128]{1,0:T(1,128)}', space=vmem, size = 0x12000, scoped, tag = 'internal scratch']
  %s0 = inlined_call_operand.vmem [shape: f32[50,16], index: 0, kind: input, shape index: {}]
  %s1 = inlined_call_operand.vmem [shape: f32[16,32], index: 1, kind: input, shape index: {}]
  %s2 = inlined_call_operand.vmem [shape: f32[1,32], index: 2, kind: input, shape index: {}]
  %s3 = inlined_call_operand.vmem [shape: f32[32,4], index: 3, kind: input, shape index: {}]
  %s4 = inlined_call_operand.vmem [shape: f32[1,4], index: 4, kind: input, shape index: {}]
  %s5 = inlined_call_operand.vmem [shape: f32[50,4], index: 5, kind: output, shape index: {}]
  %s6 = sld [smem:[#allocation0]]
  $region101: #{tpu_custom_call.1} parent=0
    _
  %s8 = ssub.s32 1, %s6
  %s9 = scalar_select 0, %s8, %s6
  $region1: #{tpu_custom_call.1} parent=0
    #allocation2 [shape = 'u8[32768]{0}', space=vmem, size = 0x8000, scoped, tag = 'output window, operand 0']
    loop: start=0, step=1, limit=4
    $region2: #{tpu_custom_call.1} parent=1 // loop_pre_header
      _
    $region3: #{tpu_custom_call.1} parent=1 // loop_header
      %s11 = sphi 0, %s15
      %p12 = scmp.ge.s32.totalorder %s11, 4
      %s21 = sphi 0, %s23
      %s24 = sphi 0, %s21
      %s25 = sphi 0, %s24
      %s41 = sphi 0, %s25
      %s45 = sphi 0, %s45
      %s47 = sphi 0, %s45
      %s48 = sphi 0, %s47
      %s62 = sphi 0, %s48
      %s66 = sphi 0, %s66
      %s68 = sphi 0, %s66
      %s69 = sphi 0, %s68
      %s83 = sphi 0, %s69
      %s87 = sphi 0, %s87
      %s89 = sphi 0, %s87
      %s90 = sphi 0, %s89
      %s104 = sphi 0, %s90
      %s108 = sphi 0, %s108
      %s110 = sphi 0, %s108
      %s111 = sphi 0, %s110
      %s125 = sphi 0, %s111
      %s131 = sphi 0, %s133
      %s134 = sphi 0, %s131
      %s135 = sphi 0, %s134
      %s151 = sphi 0, %s135
    $region4: #{tpu_custom_call.1} parent=1 // loop_header_branch
      %14 = sbr.rel (%p12) target = $region8
    $region5: #{tpu_custom_call.1} parent=1 // loop_body
      %s16 = ssub.s32 %s11, 1
      %s17 = ssub.s32 %s11, 2
      %s18 = sadd.s32 %s11, 1
      %s19 = ssub.s32 %s11, %s18
      %p20 = scmp.eq.s32.totalorder %s19, 0
      %s22 = sadd.s32 %s21, 1
      %s23 = scalar_select %p20, %s21, %s22
      %p26 = pneg %p20
      %p27 = scmp.eq.s32.totalorder %s11, 1
      %p28 = por %p26, %p27
      %p29 = scmp.ne.s32.totalorder %s21, %s24
      %p30 = scmp.eq.s32.totalorder %s11, 0
      %p31 = por %p29, %p30
      %p32 = scmp.ne.s32.totalorder %s21, %s24
      %p33 = scmp.eq.s32.totalorder %s16, 1
      %p34 = por %p32, %p33
      %p35 = scmp.ne.s32.totalorder %s24, %s25
      %p36 = scmp.eq.s32.totalorder %s16, 0
      %p37 = por %p35, %p36
      %p38 = scmp.ne.s32.totalorder %s24, %s25
      %p39 = scmp.eq.s32.totalorder %s17, 1
      %p40 = por %p38, %p39
      %p42 = scmp.ne.s32.totalorder %s25, %s41
      %p43 = scmp.eq.s32.totalorder %s17, 0
      %p44 = por %p42, %p43
      %s46 = sadd.s32 %s45, 1
      %p49 = scmp.eq.s32.totalorder %s11, 1
      %p50 = scmp.ne.s32.totalorder %s45, %s47
      %p51 = scmp.eq.s32.totalorder %s11, 0
      %p52 = por %p50, %p51
      %p53 = scmp.ne.s32.totalorder %s45, %s47
      %p54 = scmp.eq.s32.totalorder %s16, 1
      %p55 = por %p53, %p54
      %p56 = scmp.ne.s32.totalorder %s47, %s48
      %p57 = scmp.eq.s32.totalorder %s16, 0
      %p58 = por %p56, %p57
      %p59 = scmp.ne.s32.totalorder %s47, %s48
      %p60 = scmp.eq.s32.totalorder %s17, 1
      %p61 = por %p59, %p60
      %p63 = scmp.ne.s32.totalorder %s48, %s62
      %p64 = scmp.eq.s32.totalorder %s17, 0
      %p65 = por %p63, %p64
      %s67 = sadd.s32 %s66, 1
      %p70 = scmp.eq.s32.totalorder %s11, 1
      %p71 = scmp.ne.s32.totalorder %s66, %s68
      %p72 = scmp.eq.s32.totalorder %s11, 0
      %p73 = por %p71, %p72
      %p74 = scmp.ne.s32.totalorder %s66, %s68
      %p75 = scmp.eq.s32.totalorder %s16, 1
      %p76 = por %p74, %p75
      %p77 = scmp.ne.s32.totalorder %s68, %s69
      %p78 = scmp.eq.s32.totalorder %s16, 0
      %p79 = por %p77, %p78
      %p80 = scmp.ne.s32.totalorder %s68, %s69
      %p81 = scmp.eq.s32.totalorder %s17, 1
      %p82 = por %p80, %p81
      %p84 = scmp.ne.s32.totalorder %s69, %s83
      %p85 = scmp.eq.s32.totalorder %s17, 0
      %p86 = por %p84, %p85
      %s88 = sadd.s32 %s87, 1
      %p91 = scmp.eq.s32.totalorder %s11, 1
      %p92 = scmp.ne.s32.totalorder %s87, %s89
      %p93 = scmp.eq.s32.totalorder %s11, 0
      %p94 = por %p92, %p93
      %p95 = scmp.ne.s32.totalorder %s87, %s89
      %p96 = scmp.eq.s32.totalorder %s16, 1
      %p97 = por %p95, %p96
      %p98 = scmp.ne.s32.totalorder %s89, %s90
      %p99 = scmp.eq.s32.totalorder %s16, 0
      %p100 = por %p98, %p99
      %p101 = scmp.ne.s32.totalorder %s89, %s90
      %p102 = scmp.eq.s32.totalorder %s17, 1
      %p103 = por %p101, %p102
      %p105 = scmp.ne.s32.totalorder %s90, %s104
      %p106 = scmp.eq.s32.totalorder %s17, 0
      %p107 = por %p105, %p106
      %s109 = sadd.s32 %s108, 1
      %p112 = scmp.eq.s32.totalorder %s11, 1
      %p113 = scmp.ne.s32.totalorder %s108, %s110
      %p114 = scmp.eq.s32.totalorder %s11, 0
      %p115 = por %p113, %p114
      %p116 = scmp.ne.s32.totalorder %s108, %s110
      %p117 = scmp.eq.s32.totalorder %s16, 1
      %p118 = por %p116, %p117
      %p119 = scmp.ne.s32.totalorder %s110, %s111
      %p120 = scmp.eq.s32.totalorder %s16, 0
      %p121 = por %p119, %p120
      %p122 = scmp.ne.s32.totalorder %s110, %s111
      %p123 = scmp.eq.s32.totalorder %s17, 1
      %p124 = por %p122, %p123
      %p126 = scmp.ne.s32.totalorder %s111, %s125
      %p127 = scmp.eq.s32.totalorder %s17, 0
      %p128 = por %p126, %p127
      %s129 = ssub.s32 %s11, %s18
      %p130 = scmp.eq.s32.totalorder %s129, 0
      %s132 = sadd.s32 %s131, 1
      %s133 = scalar_select %p130, %s131, %s132
      %p136 = pneg %p130
      %p137 = scmp.eq.s32.totalorder %s11, 1
      %p138 = por %p136, %p137
      %p139 = scmp.ne.s32.totalorder %s131, %s134
      %p140 = scmp.eq.s32.totalorder %s11, 0
      %p141 = por %p139, %p140
      %p142 = scmp.ne.s32.totalorder %s131, %s134
      %p143 = scmp.eq.s32.totalorder %s16, 1
      %p144 = por %p142, %p143
      %p145 = scmp.ne.s32.totalorder %s134, %s135
      %p146 = scmp.eq.s32.totalorder %s16, 0
      %p147 = por %p145, %p146
      %p148 = scmp.ne.s32.totalorder %s134, %s135
      %p149 = scmp.eq.s32.totalorder %s17, 1
      %p150 = por %p148, %p149
      %p152 = scmp.ne.s32.totalorder %s135, %s151
      %p153 = scmp.eq.s32.totalorder %s17, 0
      %p154 = por %p152, %p153
      %p155 = scmp.le.s32.totalorder 1, %s11
      %p156 = scmp.lt.s32.totalorder %s11, 3
      %p157 = pnand %p155, %p156
      %p158 = pneg %p157
      // Predicated region
      $region9: #{tpu_custom_call.1} parent=5 // pred_check
        _
      $region10: #{tpu_custom_call.1} parent=5 // pred_check_branch
        %160 = sbr.rel (%p157) target = $region12
      $region11: #{tpu_custom_call.1} parent=5 // pred_region
        %s161 = ssub.s32 %s11, 1
        // Predicated region
        $region13: #{tpu_custom_call.1} parent=11 // pred_check
          %p162 = pneg %p58
        $region14: #{tpu_custom_call.1} parent=11 // pred_check_branch
          %164 = sbr.rel (%p162) target = $region16
        $region15: #{tpu_custom_call.1} parent=11 // pred_region
          _
        $region16: #{tpu_custom_call.1} parent=11 // pred_fallthru
          _
        // Predicated region
        $region17: #{tpu_custom_call.1} parent=11 // pred_check
          %p165 = pneg %p79
        $region18: #{tpu_custom_call.1} parent=11 // pred_check_branch
          %167 = sbr.rel (%p165) target = $region20
        $region19: #{tpu_custom_call.1} parent=11 // pred_region
          _
        $region20: #{tpu_custom_call.1} parent=11 // pred_fallthru
          _
        // Predicated region
        $region21: #{tpu_custom_call.1} parent=11 // pred_check
          %p168 = pneg %p100
        $region22: #{tpu_custom_call.1} parent=11 // pred_check_branch
          %170 = sbr.rel (%p168) target = $region24
        $region23: #{tpu_custom_call.1} parent=11 // pred_region
          _
        $region24: #{tpu_custom_call.1} parent=11 // pred_fallthru
          _
        // Predicated region
        $region25: #{tpu_custom_call.1} parent=11 // pred_check
          %p171 = pneg %p121
        $region26: #{tpu_custom_call.1} parent=11 // pred_check_branch
          %173 = sbr.rel (%p171) target = $region28
        $region27: #{tpu_custom_call.1} parent=11 // pred_region
          _
        $region28: #{tpu_custom_call.1} parent=11 // pred_fallthru
          _
      $region12: #{tpu_custom_call.1} parent=5 // pred_fallthru
        _
      %p174 = scmp.lt.s32.totalorder %s11, 2
      // Predicated region
      $region29: #{tpu_custom_call.1} parent=5 // pred_check
        %p175 = pneg %p174
      $region30: #{tpu_custom_call.1} parent=5 // pred_check_branch
        %177 = sbr.rel (%p175) target = $region32
      $region31: #{tpu_custom_call.1} parent=5 // pred_region
        // Predicated region
        $region33: #{tpu_custom_call.1} parent=31 // pred_check
          %p178 = pneg %p31
        $region34: #{tpu_custom_call.1} parent=31 // pred_check_branch
          %180 = sbr.rel (%p178) target = $region36
        $region35: #{tpu_custom_call.1} parent=31 // pred_region
          %s181 = smul.u32 4, %s11
          %s182 = ssub.s32 7, %s181
          %p183 = scmp.lt.s32.totalorder %s182, 4
          %s184 = scalar_select %p183, %s182, 4
          %s185 = smul.u32 128, %s184
          %p186 = scmp.lt.s32.totalorder %s181, 6
          %s187 = scalar_select %p186, %s181, 6
          %s188 = smul.addr %s187, 8
          %s189 = scalar_lea.vmem %s0, %s188
          %s190 = smul.u32 4, %s11
          %s191 = ssub.s32 7, %s190
          %p192 = scmp.lt.s32.totalorder %s191, 4
          %s193 = scalar_select %p192, %s191, 4
          %s194 = smul.u32 128, %s193
        $region36: #{tpu_custom_call.1} parent=31 // pred_fallthru
          _
      $region32: #{tpu_custom_call.1} parent=5 // pred_fallthru
        _
      %p195 = scmp.le.s32.totalorder 1, %s11
      %p196 = scmp.lt.s32.totalorder %s11, 3
      %p197 = pnand %p195, %p196
      %p198 = pneg %p197
      // Predicated region
      $region37: #{tpu_custom_call.1} parent=5 // pred_check
        _
      $region38: #{tpu_custom_call.1} parent=5 // pred_check_branch
        %200 = sbr.rel (%p197) target = $region40
      $region39: #{tpu_custom_call.1} parent=5 // pred_region
        %s201 = ssub.s32 %s11, 1
        %s202 = smul.u32 4, %s16
        %s203 = ssub.s32 7, %s202
        %p204 = scmp.lt.s32.totalorder %s203, 4
        %s205 = scalar_select %p204, %s203, 4
        %s206 = smul.u32 128, %s205
        %p207 = scmp.lt.s32.totalorder %s202, 6
        %s208 = scalar_select %p207, %s202, 6
        %s209 = smul.addr %s208, 8
        %s210 = scalar_lea.vmem %s0, %s209
        %p211 = pneg %p37
        %p212 = pneg %p34
        %p213 = pneg %p58
        %p214 = pneg %p55
        %p215 = pneg %p79
        %p216 = pneg %p76
        %p217 = pneg %p100
        %p218 = pneg %p97
        %p219 = pneg %p121
        %p220 = pneg %p118
        %p221 = pneg %p147
        %p222 = pneg %p144
        %s223 = sand.u32 %s134, 1
        %s224 = sand.u32 %s134, 1
        %s225 = smul.addr %s224, 32
        %s226 = scalar_lea.vmem [#allocation2], %s225
        %s227 = smul.u32 4, %s16
        %s228 = ssub.s32 7, %s227
        %p229 = scmp.lt.s32.totalorder %s228, 4
        %s230 = scalar_select %p229, %s228, 4
        %s231 = smul.u32 128, %s230
        %p232 = scmp.lt.s32.totalorder %s227, 6
        %s233 = scalar_select %p232, %s227, 6
        %s234 = smul.addr %s233, 8
        %s235 = scalar_lea.vmem %s0, %s234
        %s236 = smul.u32 4, %s16
        %s237 = ssub.s32 7, %s236
        %p238 = scmp.lt.s32.totalorder %s237, 4
        %s239 = scalar_select %p238, %s237, 4
        %s240 = smul.u32 128, %s239
        %s241 = smul.u32 4, %s16
        %s242 = ssub.s32 7, %s241
        %p243 = scmp.lt.s32.totalorder %s242, 4
        %s244 = scalar_select %p243, %s242, 4
        %s245 = smul.u32 128, %s244
        %v246 = vld [vmem:[%s235] sm:$0xff]
        %v247 = vld [vmem:[%s235 + $0x8] sm:$0xff]
        %v248 = vld [vmem:[%s235 + $0x10] sm:$0xff]
        %v249 = vld [vmem:[%s235 + $0x18] sm:$0xff]
        %v250 = vld [vmem:[%s1] sm:$0xff]
        %v251 = vld [vmem:[%s1 + $0x8] sm:$0xff]
        %v252 = vld [vmem:[%s2] sm:$0x1]
        %v254 = vlaneseq
        %v255 = vshrl.u32 %v254, 7
        %v256 = vsub.s32 0, %v255
        %v257 = vrot.slane %v252, %v256
        %vm259 = vcmask 130048
        %v261 = vsel %vm259, %v246, 0
        %v264 = vsel %vm259, %v247, 0
        %v267 = vsel %vm259, %v248, 0
        %v270 = vsel %vm259, %v249, 0
        %272 = vmatprep.subr.mxu0 0.0
        %273 = vmatpush1.msra.mxu0 0.0
        %274 = vmatprep.subr.mxu0 0.0
        %275 = vmatpush1.msra.mxu0 0.0
        %276 = vmatprep.subr.mxu0 0.0
        %277 = vmatpush1.msra.mxu0 0.0
        %278 = vmatprep.subr.mxu0 0.0
        %279 = vmatpush1.msra.mxu0 0.0
        %280 = vmatprep.subr.mxu0 0.0
        %281 = vmatpush1.msra.mxu0 0.0
        %282 = vmatprep.subr.mxu0 0.0
        %283 = vmatpush1.msra.mxu0 0.0
        %284 = vmatprep.subr.mxu0 0.0
        %285 = vmatpush1.msra.mxu0 0.0
        %286 = vmatprep.subr.mxu0 0.0
        %287 = vmatpush1.msra.mxu0 0.0
        %288 = vmatprep.subr.mxu0 0.0
        %289 = vmatpush1.msra.mxu0 0.0
        %290 = vmatprep.subr.mxu0 0.0
        %291 = vmatpush1.msra.mxu0 0.0
        %292 = vmatprep.subr.mxu0 0.0
        %293 = vmatpush1.msra.mxu0 0.0
        %294 = vmatprep.subr.mxu0 0.0
        %295 = vmatpush1.msra.mxu0 0.0
        %296 = vmatprep.subr.mxu0 0.0
        %297 = vmatpush1.msra.mxu0 0.0
        %298 = vmatprep.subr.mxu0 0.0
        %299 = vmatpush1.msra.mxu0 0.0
        %300 = vmatprep.subr.mxu0 0.0
        %301 = vmatpush1.msra.mxu0 %v251
        %302 = vmatprep.subr.mxu0 0.0
        %303 = vmatpush1.msra.mxu0 %v250
        %304 = vmatprep.subr.mxu0 0.0
        %305 = vmatpush2.msra.mxu0 0.0
        %306 = vmatprep.subr.mxu0 0.0
        %307 = vmatpush2.msra.mxu0 0.0
        %308 = vmatprep.subr.mxu0 0.0
        %309 = vmatpush2.msra.mxu0 0.0
        %310 = vmatprep.subr.mxu0 0.0
        %311 = vmatpush2.msra.mxu0 0.0
        %312 = vmatprep.subr.mxu0 0.0
        %313 = vmatpush2.msra.mxu0 0.0
        %314 = vmatprep.subr.mxu0 0.0
        %315 = vmatpush2.msra.mxu0 0.0
        %316 = vmatprep.subr.mxu0 0.0
        %317 = vmatpush2.msra.mxu0 0.0
        %318 = vmatprep.subr.mxu0 0.0
        %319 = vmatpush2.msra.mxu0 0.0
        %320 = vmatprep.subr.mxu0 0.0
        %321 = vmatpush2.msra.mxu0 0.0
        %322 = vmatprep.subr.mxu0 0.0
        %323 = vmatpush2.msra.mxu0 0.0
        %324 = vmatprep.subr.mxu0 0.0
        %325 = vmatpush2.msra.mxu0 0.0
        %326 = vmatprep.subr.mxu0 0.0
        %327 = vmatpush2.msra.mxu0 0.0
        %328 = vmatprep.subr.mxu0 0.0
        %329 = vmatpush2.msra.mxu0 0.0
        %330 = vmatprep.subr.mxu0 0.0
        %331 = vmatpush2.msra.mxu0 0.0
        %332 = vmatprep.subr.mxu0 0.0
        %333 = vmatpush2.msra.mxu0 0.0
        %334 = vmatprep.subr.mxu0 0.0
        %335 = vmatpush2.msra.mxu0 0.0
        %336 = vmatprep.mubr.f32.mxu0 0.0
        %337 = vmatmul.mubr.f32.gmra.mxu0 %v261
        %v338 = vpop.f32.mrf.mxu0
        %v339 = vadd.f32 %v257, %v338
        %v340 = vpop.f32.mrf.mxu0
        %341 = vmatprep.mubr.f32.mxu0 0.0
        %342 = vmatmul.mubr.f32.gmra.mxu0 %v264
        %v343 = vpop.f32.mrf.mxu0
        %v344 = vadd.f32 %v257, %v343
        %v345 = vpop.f32.mrf.mxu0
        %346 = vmatprep.mubr.f32.mxu0 0.0
        %347 = vmatmul.mubr.f32.gmra.mxu0 %v267
        %v348 = vpop.f32.mrf.mxu0
        %v349 = vadd.f32 %v257, %v348
        %v350 = vpop.f32.mrf.mxu0
        %351 = vmatprep.mubr.f32.mxu0 0.0
        %352 = vmatmul.mubr.f32.gmra.mxu0 %v270
        %v353 = vpop.f32.mrf.mxu0
        %v354 = vadd.f32 %v257, %v353
        %v355 = vpop.f32.mrf.mxu0
        %356 = vdwg.mxu0
        %v357 = vmax.f32 %v339, 0.0
        %v358 = vmax.f32 %v344, 0.0
        %v359 = vmax.f32 %v349, 0.0
        %v360 = vmax.f32 %v354, 0.0
        %v361 = vld [vmem:[%s3] sm:$0xff]
        %v362 = vld [vmem:[%s3 + $0x8] sm:$0xff]
        %v363 = vld [vmem:[%s3 + $0x10] sm:$0xff]
        %v364 = vld [vmem:[%s3 + $0x18] sm:$0xff]
        %v365 = vld [vmem:[%s4] sm:$0x1]
        %v367 = vlaneseq
        %v368 = vshrl.u32 %v367, 7
        %v369 = vsub.s32 0, %v368
        %v370 = vrot.slane %v365, %v369
        %vm372 = vcmask 261120
        %v374 = vsel %vm372, %v357, 0
        %v377 = vsel %vm372, %v358, 0
        %v380 = vsel %vm372, %v359, 0
        %v383 = vsel %vm372, %v360, 0
        %385 = vmatprep.subr.mxu0 0.0
        %386 = vmatpush1.msra.mxu0 0.0
        %387 = vmatprep.subr.mxu0 0.0
        %388 = vmatpush1.msra.mxu0 0.0
        %389 = vmatprep.subr.mxu0 0.0
        %390 = vmatpush1.msra.mxu0 0.0
        %391 = vmatprep.subr.mxu0 0.0
        %392 = vmatpush1.msra.mxu0 0.0
        %393 = vmatprep.subr.mxu0 0.0
        %394 = vmatpush1.msra.mxu0 0.0
        %395 = vmatprep.subr.mxu0 0.0
        %396 = vmatpush1.msra.mxu0 0.0
        %397 = vmatprep.subr.mxu0 0.0
        %398 = vmatpush1.msra.mxu0 0.0
        %399 = vmatprep.subr.mxu0 0.0
        %400 = vmatpush1.msra.mxu0 0.0
        %401 = vmatprep.subr.mxu0 0.0
        %402 = vmatpush1.msra.mxu0 0.0
        %403 = vmatprep.subr.mxu0 0.0
        %404 = vmatpush1.msra.mxu0 0.0
        %405 = vmatprep.subr.mxu0 0.0
        %406 = vmatpush1.msra.mxu0 0.0
        %407 = vmatprep.subr.mxu0 0.0
        %408 = vmatpush1.msra.mxu0 0.0
        %409 = vmatprep.subr.mxu0 0.0
        %410 = vmatpush1.msra.mxu0 %v364
        %411 = vmatprep.subr.mxu0 0.0
        %412 = vmatpush1.msra.mxu0 %v363
        %413 = vmatprep.subr.mxu0 0.0
        %414 = vmatpush1.msra.mxu0 %v362
        %415 = vmatprep.subr.mxu0 0.0
        %416 = vmatpush1.msra.mxu0 %v361
        %417 = vmatprep.subr.mxu0 0.0
        %418 = vmatpush2.msra.mxu0 0.0
        %419 = vmatprep.subr.mxu0 0.0
        %420 = vmatpush2.msra.mxu0 0.0
        %421 = vmatprep.subr.mxu0 0.0
        %422 = vmatpush2.msra.mxu0 0.0
        %423 = vmatprep.subr.mxu0 0.0
        %424 = vmatpush2.msra.mxu0 0.0
        %425 = vmatprep.subr.mxu0 0.0
        %426 = vmatpush2.msra.mxu0 0.0
        %427 = vmatprep.subr.mxu0 0.0
        %428 = vmatpush2.msra.mxu0 0.0
        %429 = vmatprep.subr.mxu0 0.0
        %430 = vmatpush2.msra.mxu0 0.0
        %431 = vmatprep.subr.mxu0 0.0
        %432 = vmatpush2.msra.mxu0 0.0
        %433 = vmatprep.subr.mxu0 0.0
        %434 = vmatpush2.msra.mxu0 0.0
        %435 = vmatprep.subr.mxu0 0.0
        %436 = vmatpush2.msra.mxu0 0.0
        %437 = vmatprep.subr.mxu0 0.0
        %438 = vmatpush2.msra.mxu0 0.0
        %439 = vmatprep.subr.mxu0 0.0
        %440 = vmatpush2.msra.mxu0 0.0
        %441 = vmatprep.subr.mxu0 0.0
        %442 = vmatpush2.msra.mxu0 0.0
        %443 = vmatprep.subr.mxu0 0.0
        %444 = vmatpush2.msra.mxu0 0.0
        %445 = vmatprep.subr.mxu0 0.0
        %446 = vmatpush2.msra.mxu0 0.0
        %447 = vmatprep.subr.mxu0 0.0
        %448 = vmatpush2.msra.mxu0 0.0
        %449 = vmatprep.mubr.f32.mxu0 0.0
        %450 = vmatmul.mubr.f32.gmra.mxu0 %v374
        %v451 = vpop.f32.mrf.mxu0
        %v452 = vadd.f32 %v370, %v451
        %v453 = vpop.f32.mrf.mxu0
        %454 = vmatprep.mubr.f32.mxu0 0.0
        %455 = vmatmul.mubr.f32.gmra.mxu0 %v377
        %v456 = vpop.f32.mrf.mxu0
        %v457 = vadd.f32 %v370, %v456
        %v458 = vpop.f32.mrf.mxu0
        %459 = vmatprep.mubr.f32.mxu0 0.0
        %460 = vmatmul.mubr.f32.gmra.mxu0 %v380
        %v461 = vpop.f32.mrf.mxu0
        %v462 = vadd.f32 %v370, %v461
        %v463 = vpop.f32.mrf.mxu0
        %464 = vmatprep.mubr.f32.mxu0 0.0
        %465 = vmatmul.mubr.f32.gmra.mxu0 %v383
        %v466 = vpop.f32.mrf.mxu0
        %v467 = vadd.f32 %v370, %v466
        %v468 = vpop.f32.mrf.mxu0
        %469 = vdwg.mxu0
        %vm470 = vcmask 31744
        %v471 = vsel %vm470, %v452, -inf
        %472 = vmax.xlane.f32.xlu0 %v471
        %v473 = vpop.xlane.xlu0 %472
        %v474 = vsel %vm470, %v457, -inf
        %475 = vmax.xlane.f32.xlu0 %v474
        %v476 = vpop.xlane.xlu0 %475
        %v477 = vsel %vm470, %v462, -inf
        %478 = vmax.xlane.f32.xlu0 %v477
        %v479 = vpop.xlane.xlu0 %478
        %v480 = vsel %vm470, %v467, -inf
        %481 = vmax.xlane.f32.xlu0 %v480
        %v482 = vpop.xlane.xlu0 %481
        %v483 = vsub.f32 %v452, %v473
        %v484 = vsub.f32 %v457, %v476
        %v485 = vsub.f32 %v462, %v479
        %v486 = vsub.f32 %v467, %v482
        %v487 = vmul.f32 %v483, 1.442695
        %v488 = vpow.pop %v487
        %v489 = vmul.f32 %v484, 1.442695
        %v490 = vpow.pop %v489
        %v491 = vmul.f32 %v485, 1.442695
        %v492 = vpow.pop %v491
        %v493 = vmul.f32 %v486, 1.442695
        %v494 = vpow.pop %v493
        %v495 = vsel %vm470, %v488, 0.0
        %496 = vadd.xlane.f32.xlu0 %v495
        %v497 = vpop.xlane.xlu0 %496
        %v498 = vsel %vm470, %v490, 0.0
        %499 = vadd.xlane.f32.xlu0 %v498
        %v500 = vpop.xlane.xlu0 %499
        %v501 = vsel %vm470, %v492, 0.0
        %502 = vadd.xlane.f32.xlu0 %v501
        %v503 = vpop.xlane.xlu0 %502
        %v504 = vsel %vm470, %v494, 0.0
        %505 = vadd.xlane.f32.xlu0 %v504
        %v506 = vpop.xlane.xlu0 %505
        %v507 = vrcp.pop %v497
        %v508 = vmul.f32 %v488, %v507
        %v509 = vrcp.pop %v500
        %v510 = vmul.f32 %v490, %v509
        %v511 = vrcp.pop %v503
        %v512 = vmul.f32 %v492, %v511
        %v513 = vrcp.pop %v506
        %v514 = vmul.f32 %v494, %v513
        %515 = vst.msk [vmem:[%s226] sm:$0xff] %vm470, %v508
        %516 = vst.msk [vmem:[%s226 + $0x8] sm:$0xff] %vm470, %v510
        %517 = vst.msk [vmem:[%s226 + $0x10] sm:$0xff] %vm470, %v512
        %518 = vst.msk [vmem:[%s226 + $0x18] sm:$0xff] %vm470, %v514
        %s519 = sand.u32 %s134, 1
        %s520 = sand.u32 %s134, 1
        %s521 = smul.addr %s520, 32
        %s522 = scalar_lea.vmem [#allocation2], %s521
        // Predicated region
        $region41: #{tpu_custom_call.1} parent=39 // pred_check
          %p523 = pneg %p144
        $region42: #{tpu_custom_call.1} parent=39 // pred_check_branch
          %525 = sbr.rel (%p523) target = $region44
        $region43: #{tpu_custom_call.1} parent=39 // pred_region
          %s526 = smul.u32 4, %s16
          %s527 = ssub.s32 7, %s526
          %p528 = scmp.lt.s32.totalorder %s527, 4
          %s529 = scalar_select %p528, %s527, 4
          %s530 = smul.u32 128, %s529
          %p531 = scmp.ne.s32.totalorder 0, %s530
          %s532 = smul.addr %s526, 8
          %s533 = scalar_lea.vmem %s5, %s532
          // Predicated region
          $region45: #{tpu_custom_call.1} parent=43 // pred_check
            %p534 = pneg %p531
          $region46: #{tpu_custom_call.1} parent=43 // pred_check_branch
            %536 = sbr.rel (%p534) target = $region48
          $region47: #{tpu_custom_call.1} parent=43 // pred_region
            // Predicated region
            $region49: #{tpu_custom_call.1} parent=47 // pred_check
              _
            $region50: #{tpu_custom_call.1} parent=47 // pred_check_branch
              %538 = sbr.rel (0) target = $region52
            $region51: #{tpu_custom_call.1} parent=47 // pred_region
              // Predicated region
              $region71: #{tpu_custom_call.1} parent=51 // pred_check
                _
              $region72: #{tpu_custom_call.1} parent=51 // pred_check_branch
                %594 = sbr.rel (0) target = $region74
              $region73: #{tpu_custom_call.1} parent=51 // pred_region
                %s595 = sshrl.u32 %s529, 2
                // While loop
                $region75: #{tpu_custom_call.1} parent=73 // loop_pre_header
                  _
                $region76: #{tpu_custom_call.1} parent=73 // loop_header
                  %s597 = sphi 0, %s599
                  %p598 = scmp.ge.s32.totalorder %s597, %s595
                  %s602 = sphi 0, %s615
                  %s603 = sphi %s522, %s618
                  %s604 = sphi %s533, %s619
                $region77: #{tpu_custom_call.1} parent=73 // loop_header_branch
                  %601 = sbr.rel (%p598) target = $region81
                $region78: #{tpu_custom_call.1} parent=73 // loop_body
                  %v605 = vld [vmem:[%s603] sm:$0xff]
                  %606 = vst [vmem:[%s604] sm:$0xff] %v605
                  %v607 = vld [vmem:[%s603 + $0x8] sm:$0xff]
                  %608 = vst [vmem:[%s604 + $0x8] sm:$0xff] %v607
                  %v609 = vld [vmem:[%s603 + $0x10] sm:$0xff]
                  %610 = vst [vmem:[%s604 + $0x10] sm:$0xff] %v609
                  %v611 = vld [vmem:[%s603 + $0x18] sm:$0xff]
                  %612 = vst [vmem:[%s604 + $0x18] sm:$0xff] %v611
                  %s613 = sadd.s32 1, %s602
                  %p614 = scmp.ge.s32.totalorder %s613, %s595
                  %s615 = scalar_select %p614, 0, %s613
                  %s616 = smul.u32 %s615, 32
                  %s617 = smul.u32 %s615, 32
                  %s618 = scalar_lea.vmem %s522, %s616 [#allocation2]
                  %s619 = scalar_lea.vmem %s533, %s617
                $region79: #{tpu_custom_call.1} parent=73 // loop_footer
                  %s599 = sadd.s32 %s597, 1
                $region80: #{tpu_custom_call.1} parent=73 // loop_footer_branch
                  %596 = sbr.rel target = $region76
                $region81: #{tpu_custom_call.1} parent=73 // loop_exit
                  _
                %s620 = sshrl.u32 %s529, 2
                %s621 = sand.u32 %s529, 3
                %s622 = smul.u32 %s620, 4
                %s623 = smul.u32 8, %s622
                %s624 = scalar_lea.vmem %s522, %s623 [#allocation2]
                %s625 = smul.u32 8, %s622
                %s626 = scalar_lea.vmem %s533, %s625
                // While loop
                $region82: #{tpu_custom_call.1} parent=73 // loop_pre_header
                  _
                $region83: #{tpu_custom_call.1} parent=73 // loop_header
                  %s628 = sphi 0, %s630
                  %p629 = scmp.ge.s32.totalorder %s628, %s621
                  %s633 = sphi 0, %s640
                  %s634 = sphi %s624, %s643
                  %s635 = sphi %s626, %s644
                $region84: #{tpu_custom_call.1} parent=73 // loop_header_branch
                  %632 = sbr.rel (%p629) target = $region88
                $region85: #{tpu_custom_call.1} parent=73 // loop_body
                  %v636 = vld [vmem:[%s634] sm:$0xff]
                  %637 = vst [vmem:[%s635] sm:$0xff] %v636
                  %s638 = sadd.s32 1, %s633
                  %p639 = scmp.ge.s32.totalorder %s638, %s621
                  %s640 = scalar_select %p639, 0, %s638
                  %s641 = smul.u32 %s640, 8
                  %s642 = smul.u32 %s640, 8
                  %s643 = scalar_lea.vmem %s624, %s641 [#allocation2]
                  %s644 = scalar_lea.vmem %s626, %s642
                $region86: #{tpu_custom_call.1} parent=73 // loop_footer
                  %s630 = sadd.s32 %s628, 1
                $region87: #{tpu_custom_call.1} parent=73 // loop_footer_branch
                  %627 = sbr.rel target = $region83
                $region88: #{tpu_custom_call.1} parent=73 // loop_exit
                  _
              $region74: #{tpu_custom_call.1} parent=51 // pred_fallthru
                _
              // Predicated region
              $region89: #{tpu_custom_call.1} parent=51 // pred_check
                _
              $region90: #{tpu_custom_call.1} parent=51 // pred_check_branch
                %646 = sbr.rel target = $region92
              $region91: #{tpu_custom_call.1} parent=51 // pred_region
                _
              $region92: #{tpu_custom_call.1} parent=51 // pred_fallthru
                _
            $region52: #{tpu_custom_call.1} parent=47 // pred_fallthru
              _
            // Predicated region
            $region53: #{tpu_custom_call.1} parent=47 // pred_check
              _
            $region54: #{tpu_custom_call.1} parent=47 // pred_check_branch
              %540 = sbr.rel target = $region56
            $region55: #{tpu_custom_call.1} parent=47 // pred_region
              %s542 = ssub.s32 256, 1
              %s543 = sshrl.u32 %s529, 2
              // While loop
              $region57: #{tpu_custom_call.1} parent=55 // loop_pre_header
                _
              $region58: #{tpu_custom_call.1} parent=55 // loop_header
                %s545 = sphi 0, %s547
                %p546 = scmp.ge.s32.totalorder %s545, %s543
                %s550 = sphi 0, %s563
                %s551 = sphi %s522, %s566
                %s552 = sphi %s533, %s567
              $region59: #{tpu_custom_call.1} parent=55 // loop_header_branch
                %549 = sbr.rel (%p546) target = $region63
              $region60: #{tpu_custom_call.1} parent=55 // loop_body
                %v553 = vld [vmem:[%s551] sm:%s542]
                %554 = vst [vmem:[%s552] sm:%s542] %v553
                %v555 = vld [vmem:[%s551 + $0x8] sm:%s542]
                %556 = vst [vmem:[%s552 + $0x8] sm:%s542] %v555
                %v557 = vld [vmem:[%s551 + $0x10] sm:%s542]
                %558 = vst [vmem:[%s552 + $0x10] sm:%s542] %v557
                %v559 = vld [vmem:[%s551 + $0x18] sm:%s542]
                %560 = vst [vmem:[%s552 + $0x18] sm:%s542] %v559
                %s561 = sadd.s32 1, %s550
                %p562 = scmp.ge.s32.totalorder %s561, %s543
                %s563 = scalar_select %p562, 0, %s561
                %s564 = smul.u32 %s563, 32
                %s565 = smul.u32 %s563, 32
                %s566 = scalar_lea.vmem %s522, %s564 [#allocation2]
                %s567 = scalar_lea.vmem %s533, %s565
              $region61: #{tpu_custom_call.1} parent=55 // loop_footer
                %s547 = sadd.s32 %s545, 1
              $region62: #{tpu_custom_call.1} parent=55 // loop_footer_branch
                %544 = sbr.rel target = $region58
              $region63: #{tpu_custom_call.1} parent=55 // loop_exit
                _
              %s568 = sshrl.u32 %s529, 2
              %s569 = sand.u32 %s529, 3
              %s570 = smul.u32 %s568, 4
              %s571 = smul.u32 8, %s570
              %s572 = scalar_lea.vmem %s522, %s571 [#allocation2]
              %s573 = smul.u32 8, %s570
              %s574 = scalar_lea.vmem %s533, %s573
              // While loop
              $region64: #{tpu_custom_call.1} parent=55 // loop_pre_header
                _
              $region65: #{tpu_custom_call.1} parent=55 // loop_header
                %s576 = sphi 0, %s578
                %p577 = scmp.ge.s32.totalorder %s576, %s569
                %s581 = sphi 0, %s588
                %s582 = sphi %s572, %s591
                %s583 = sphi %s574, %s592
              $region66: #{tpu_custom_call.1} parent=55 // loop_header_branch
                %580 = sbr.rel (%p577) target = $region70
              $region67: #{tpu_custom_call.1} parent=55 // loop_body
                %v584 = vld [vmem:[%s582] sm:%s542]
                %585 = vst [vmem:[%s583] sm:%s542] %v584
                %s586 = sadd.s32 1, %s581
                %p587 = scmp.ge.s32.totalorder %s586, %s569
                %s588 = scalar_select %p587, 0, %s586
                %s589 = smul.u32 %s588, 8
                %s590 = smul.u32 %s588, 8
                %s591 = scalar_lea.vmem %s572, %s589 [#allocation2]
                %s592 = scalar_lea.vmem %s574, %s590
              $region68: #{tpu_custom_call.1} parent=55 // loop_footer
                %s578 = sadd.s32 %s576, 1
              $region69: #{tpu_custom_call.1} parent=55 // loop_footer_branch
                %575 = sbr.rel target = $region65
              $region70: #{tpu_custom_call.1} parent=55 // loop_exit
                _
            $region56: #{tpu_custom_call.1} parent=47 // pred_fallthru
              _
          $region48: #{tpu_custom_call.1} parent=43 // pred_fallthru
            _
          %647 = vnop
        $region44: #{tpu_custom_call.1} parent=39 // pred_fallthru
          _
      $region40: #{tpu_custom_call.1} parent=5 // pred_fallthru
        _
      %p648 = scmp.le.s32.totalorder 2, %s11
      // Predicated region
      $region93: #{tpu_custom_call.1} parent=5 // pred_check
        %p649 = pneg %p648
      $region94: #{tpu_custom_call.1} parent=5 // pred_check_branch
        %651 = sbr.rel (%p649) target = $region96
      $region95: #{tpu_custom_call.1} parent=5 // pred_region
        %s652 = ssub.s32 %s11, 2
        // Predicated region
        $region97: #{tpu_custom_call.1} parent=95 // pred_check
          %p653 = pneg %p150
        $region98: #{tpu_custom_call.1} parent=95 // pred_check_branch
          %655 = sbr.rel (%p653) target = $region100
        $region99: #{tpu_custom_call.1} parent=95 // pred_region
          %s656 = sand.u32 %s135, 1
          %s657 = sand.u32 %s135, 1
          %s658 = smul.addr %s657, 32
          %s659 = scalar_lea.vmem [#allocation2], %s658
        $region100: #{tpu_custom_call.1} parent=95 // pred_fallthru
          _
      $region96: #{tpu_custom_call.1} parent=5 // pred_fallthru
        _
    $region6: #{tpu_custom_call.1} parent=1 // loop_footer
      %s15 = sadd.s32 1, %s11
    $region7: #{tpu_custom_call.1} parent=1 // loop_footer_branch
      %10 = sbr.rel target = $region3
    $region8: #{tpu_custom_call.1} parent=1 // loop_exit
      _

</llo_original>
